<compile_context>
chip_gen: v6e
topology: v6e:2x2x1
jax: 0.10.0
libtpu: 0.0.40
codegen_flags: <defaults>
</compile_context>

<pallas_src>
import functools

import jax
import jax.numpy as jnp
from jax import lax
from jax.experimental import pallas as pl
from jax.experimental.pallas import tpu as pltpu

_CHUNK_ELEMS = 8 * 128        # trajectory elements per (8,128) f32 vreg chunk
_MAX_CHUNKS_PER_STEP = 16     # 16 * 56 * 128 * 4 B = 448 KiB per operand block
_SMALL_N = 1024               # below this, fused XLA beats a Pallas launch


# --------------------------------------------------------------------------
# In-kernel math
# --------------------------------------------------------------------------
def _atan_pos(x):
    """Cephes-style f32 arctan for x >= 0 (mul/add/rcp/select only: VPU+EUP)."""
    tan3pi8 = 2.414213562373095
    tanpi8 = 0.4142135623730951
    big = x > tan3pi8
    mid_or_big = x > tanpi8
    x_big = -pl.reciprocal(jnp.maximum(x, 1e-30), approx=True)
    x_mid = (x - 1.0) * pl.reciprocal(x + 1.0, approx=True)
    xr = jnp.where(big, x_big, jnp.where(mid_or_big, x_mid, x))
    pi4 = jnp.float32(jnp.pi / 4)
    # offset: pi/2 (big), pi/4 (mid), 0 (low) via two independent selects
    y0 = jnp.where(big, pi4, 0.0) + jnp.where(mid_or_big, pi4, 0.0)
    z = xr * xr
    p = (((8.05374449538e-2 * z - 1.38776856032e-1) * z
          + 1.99777106478e-1) * z - 3.33329491539e-1) * z * xr + xr
    return y0 + p


def _geodesic_chunk(t1, t2):
    """t1, t2: (56,128) component-stacked slabs (rows [8c,8c+8) = component c).
    Returns per-element squared se(3) tangent norm of X1 * X2^{-1}, (8,128)."""
    def comp(t, i):
        return t[8 * i:8 * (i + 1), :]

    t1x, t1y, t1z = comp(t1, 0), comp(t1, 1), comp(t1, 2)
    q1x, q1y, q1z, q1w = comp(t1, 3), comp(t1, 4), comp(t1, 5), comp(t1, 6)
    t2x, t2y, t2z = comp(t2, 0), comp(t2, 1), comp(t2, 2)
    q2x, q2y, q2z, q2w = comp(t2, 3), comp(t2, 4), comp(t2, 5), comp(t2, 6)

    def qrot(qx, qy, qz, qw, vx, vy, vz):
        # R(q) v = v + 2 w (u x v) + 2 u x (u x v), unit quaternion q = (u, w)
        cx = qy * vz - qz * vy
        cy = qz * vx - qx * vz
        cz = qx * vy - qy * vx
        ccx = qy * cz - qz * cy
        ccy = qz * cx - qx * cz
        ccz = qx * cy - qy * cx
        return (vx + 2.0 * (qw * cx + ccx),
                vy + 2.0 * (qw * cy + ccy),
                vz + 2.0 * (qw * cz + ccz))

    # X2^{-1} = (-R(q2)^T t2, conj(q2))
    q2ix, q2iy, q2iz, q2iw = -q2x, -q2y, -q2z, q2w
    rx, ry, rz = qrot(q2ix, q2iy, q2iz, q2iw, t2x, t2y, t2z)
    t2ix, t2iy, t2iz = -rx, -ry, -rz

    # X = X1 * X2^{-1}  (SE3: t = t1 + R(q1) t2i, q = q1 (x) q2i)
    rx, ry, rz = qrot(q1x, q1y, q1z, q1w, t2ix, t2iy, t2iz)
    tx, ty, tz = t1x + rx, t1y + ry, t1z + rz
    qw = q1w * q2iw - q1x * q2ix - q1y * q2iy - q1z * q2iz
    qx = q1w * q2ix + q1x * q2iw + q1y * q2iz - q1z * q2iy
    qy = q1w * q2iy - q1x * q2iz + q1y * q2iw + q1z * q2ix
    qz = q1w * q2iz + q1x * q2iy - q1y * q2ix + q1z * q2iw

    # shortest-path canonicalization: theta from |qw|, sign folded into kfac
    sgn = jnp.where(qw < 0.0, jnp.float32(-1.0), jnp.float32(1.0))
    aqw = jnp.abs(qw)

    # SO(3) log of the relative quaternion
    vn = jnp.sqrt(qx * qx + qy * qy + qz * qz)
    inv_qw = pl.reciprocal(jnp.maximum(aqw, 1e-30), approx=True)
    theta = 2.0 * _atan_pos(vn * inv_qw)
    inv_vn = pl.reciprocal(jnp.maximum(vn, 1e-12), approx=True)
    kfac = sgn * jnp.where(vn < 1e-7, 2.0 * inv_qw, theta * inv_vn)
    px, py, pz = kfac * qx, kfac * qy, kfac * qz          # phi (rotation part)

    # rho = Jl(phi)^{-1} t.  The two c_exact terms nearly cancel near the
    # series cutoff, so use exact divides here (off the op-count hot path).
    th2 = theta * theta
    c_exact = (1.0 / jnp.maximum(th2, 1e-12)
               - aqw / (2.0 * jnp.maximum(theta * vn, 1e-12)))
    c_series = (1.0 / 12.0) + th2 * (1.0 / 720.0) + th2 * th2 * (1.0 / 30240.0)
    cc = jnp.where(theta < 0.5, c_series, c_exact)

    c1x = py * tz - pz * ty
    c1y = pz * tx - px * tz
    c1z = px * ty - py * tx
    c2x = py * c1z - pz * c1y
    c2y = pz * c1x - px * c1z
    c2z = px * c1y - py * c1x
    rhox = tx - 0.5 * c1x + cc * c2x
    rhoy = ty - 0.5 * c1y + cc * c2y
    rhoz = tz - 0.5 * c1z + cc * c2z

    # squared se(3) tangent, summed over its 6 components (per element)
    return (rhox * rhox + rhoy * rhoy + rhoz * rhoz
            + px * px + py * py + pz * pz)


def _geodesic_kernel(t1_ref, t2_ref, psum_ref, *, chunks_per_step):
    # t*_ref: (chunks_per_step, 56, 128).  psum_ref: (8, 128) per-step partial
    # sum of squared tangents.  The fori_loop over one-vreg chunks bounds vreg
    # pressure (~30 live (8,128) temporaries, 1 vreg each) regardless of the
    # HBM block size; chunk index goes on the leading (untiled) ref dim.
    def body(j, acc):
        return acc + _geodesic_chunk(t1_ref[j], t2_ref[j])

    psum_ref[...] = lax.fori_loop(0, chunks_per_step, body,
                                  jnp.zeros((8, 128), jnp.float32))


# --------------------------------------------------------------------------
# Wrapper
# --------------------------------------------------------------------------
def _pack_traj(x, n, n_pad, n_chunks):
    """[k,tau,7] SE(3) -> [n_chunks, 56, 128] component-stacked chunk slabs.
    One tail pad + one transpose pass; padding is the identity (qw = 1) so
    padded elements contribute exactly 0."""
    # TODO(synk): emit component-major layout upstream / cache the packing of
    # trajectories reused across steps (e.g. ground truth) to skip this pass.
    flat = x.reshape(n, 7)
    if n_pad > n:
        pad = jnp.zeros((n_pad - n, 7), x.dtype).at[:, 6].set(1.0)
        flat = jnp.concatenate([flat, pad], axis=0)
    return (flat.reshape(n_chunks, 8, 128, 7)
                .transpose(0, 3, 1, 2)
                .reshape(n_chunks, 56, 128))


def _geodesic_sq_sum_pallas(traj1, traj2):
    """Sum over all elements and all 6 tangent components of the squared
    geodesic distance between two packed SE(3) trajectories."""
    k, tau, _ = traj1.shape
    n = k * tau
    n_chunks = -(-n // _CHUNK_ELEMS)
    # >= 2 grid steps whenever possible so "parallel" feeds both v7x cores;
    # otherwise as few steps as the per-step chunk cap allows.
    n_steps = min(n_chunks, max(2, -(-n_chunks // _MAX_CHUNKS_PER_STEP)))
    cps = -(-n_chunks // n_steps)            # chunks per grid step
    c_total = n_steps * cps
    n_pad = c_total * _CHUNK_ELEMS

    t1p = _pack_traj(traj1, n, n_pad, c_total)
    t2p = _pack_traj(traj2, n, n_pad, c_total)

    psum = pl.pallas_call(
        functools.partial(_geodesic_kernel, chunks_per_step=cps),
        out_shape=jax.ShapeDtypeStruct((n_steps * 8, 128), jnp.float32),
        grid=(n_steps,),
        in_specs=[pl.BlockSpec((cps, 56, 128), lambda i: (i, 0, 0)),
                  pl.BlockSpec((cps, 56, 128), lambda i: (i, 0, 0))],
        out_specs=pl.BlockSpec((8, 128), lambda i: (i, 0)),
        compiler_params=pltpu.CompilerParams(
            dimension_semantics=("parallel",)),
        cost_estimate=pl.CostEstimate(
            flops=180 * n_pad,
            transcendentals=7 * n_pad,
            bytes_accessed=2 * 7 * 4 * n_pad + n_steps * 8 * 128 * 4),
    )(t1p, t2p)
    return jnp.sum(psum)


def traj_loss(traj1, traj2, v1=None, v2=None, dv1=None, dv2=None):
    """Pallas implementation of TrajLoss.forward with dim=None."""
    # TODO(synk): the optional `dim`-indexed branch of TrajLoss.forward is not
    # implemented; only the default dim=None branch is reproduced.
    # TODO(synk): forward-only; no custom_vjp is attached to the pallas_call.
    f32 = jnp.float32
    k, tau, _ = traj1.shape
    n = k * tau
    t1 = traj1.astype(f32)
    t2 = traj2.astype(f32)

    if n < _SMALL_N:
        # Small trajectories: a Pallas launch + padding to a full tile is pure
        # overhead; the fused XLA path is faster.
        t_loss = _geodesic_sq_ref(t1, t2).sum(-1).mean()
    else:
        t_loss = _geodesic_sq_sum_pallas(t1, t2) / n       # .sum(-1).mean()

    # Plain MSE terms stay in XLA (trivially fused; no benefit from Pallas).
    v_loss = (jnp.mean((v1.astype(f32) - v2.astype(f32)) ** 2)
              if (v1 is not None and v2 is not None) else 0.0)
    dv_loss = (jnp.mean((dv1.astype(f32) - dv2.astype(f32)) ** 2)
               if (dv1 is not None and dv2 is not None) else 0.0)
    return t_loss + v_loss + dv_loss


# ----------------------- pure-JAX reference (fast path + checking) ---------
def _quat_rotate(q, v):
    u, w = q[..., :3], q[..., 3:4]
    c = jnp.cross(u, v)
    return v + 2.0 * (w * c + jnp.cross(u, c))


def _quat_mul(a, b):
    ax, ay, az, aw = (a[..., i] for i in range(4))
    bx, by, bz, bw = (b[..., i] for i in range(4))
    return jnp.stack([
        aw * bx + ax * bw + ay * bz - az * by,
        aw * by - ax * bz + ay * bw + az * bx,
        aw * bz + ax * by - ay * bx + az * bw,
        aw * bw - ax * bx - ay * by - az * bz,
    ], axis=-1)


def _geodesic_sq_ref(traj1, traj2):
    t1, q1 = traj1[..., :3], traj1[..., 3:]
    t2, q2 = traj2[..., :3], traj2[..., 3:]
    q2i = q2 * jnp.array([-1.0, -1.0, -1.0, 1.0], traj1.dtype)
    t2i = -_quat_rotate(q2i, t2)
    q = _quat_mul(q1, q2i)
    t = t1 + _quat_rotate(q1, t2i)
    q = jnp.where(q[..., 3:4] < 0, -q, q)
    u, w = q[..., :3], q[..., 3:4]
    vn = jnp.linalg.norm(u, axis=-1, keepdims=True)
    theta = 2.0 * jnp.arctan2(vn, w)
    kfac = jnp.where(vn < 1e-7, 2.0 / w, theta / jnp.maximum(vn, 1e-30))
    phi = kfac * u
    th2 = theta * theta
    c_exact = (1.0 / jnp.maximum(th2, 1e-12)
               - w / (2.0 * jnp.maximum(theta * vn, 1e-12)))
    c_series = 1.0 / 12.0 + th2 / 720.0 + th2 * th2 / 30240.0
    c = jnp.where(theta < 0.5, c_series, c_exact)
    c1 = jnp.cross(phi, t)
    rho = t - 0.5 * c1 + c * jnp.cross(phi, c1)
    d = jnp.concatenate([rho, phi], axis=-1)
    return d * d


def traj_loss_ref(traj1, traj2, v1=None, v2=None, dv1=None, dv2=None):
    t_loss = _geodesic_sq_ref(traj1, traj2).sum(-1).mean()
    v_loss = jnp.mean((v1 - v2) ** 2) if (v1 is not None and v2 is not None) else 0.0
    dv_loss = jnp.mean((dv1 - dv2) ** 2) if (dv1 is not None and dv2 is not None) else 0.0
    return t_loss + v_loss + dv_loss


if __name__ == "__main__":
    key = jax.random.PRNGKey(0)
    keys = jax.random.split(key, 12)

    def rand_se3(kt, kq, k, tau):
        t = 0.5 * jax.random.normal(kt, (k, tau, 3), jnp.float32)
        q = jax.random.normal(kq, (k, tau, 4), jnp.float32)
        q = q / jnp.linalg.norm(q, axis=-1, keepdims=True)
        q = jnp.where(q[..., 3:4] < 0, -q, q)
        return jnp.concatenate([t, q], axis=-1)          # [k, tau, 7] SE(3)

    # --- small case (k=2, tau=8): fused-XLA fast path + velocity terms ------
    k_s, tau_s = 2, 8
    traj1_s = rand_se3(keys[0], keys[1], k_s, tau_s)
    traj2_s = rand_se3(keys[2], keys[3], k_s, tau_s)
    v1 = jax.random.normal(keys[4], (k_s, tau_s, 6), jnp.float32)
    v2 = jax.random.normal(keys[5], (k_s, tau_s, 6), jnp.float32)
    dv1 = jax.random.normal(keys[6], (k_s, tau_s, 6), jnp.float32)
    dv2 = jax.random.normal(keys[7], (k_s, tau_s, 6), jnp.float32)
    out_s = jax.block_until_ready(traj_loss(traj1_s, traj2_s, v1, v2, dv1, dv2))
    ref_s = traj_loss_ref(traj1_s, traj2_s, v1, v2, dv1, dv2)
    assert bool(jnp.isfinite(out_s)), out_s
    assert abs(float(out_s) - float(ref_s)) <= 5e-3 * max(1.0, abs(float(ref_s))), (out_s, ref_s)

    # --- medium case (k=4, tau=2000): Pallas geodesic kernel path -----------
    # n = 8000 -> 8 chunks, 2 "parallel" grid steps of 4 chunks, 192 padded
    # identity elements (exercise padding + the in-kernel chunk loop).
    k_m, tau_m = 4, 2000
    traj1_m = rand_se3(keys[8], keys[9], k_m, tau_m)
    traj2_m = rand_se3(keys[10], keys[11], k_m, tau_m)
    out_m = jax.block_until_ready(traj_loss(traj1_m, traj2_m))
    ref_m = traj_loss_ref(traj1_m, traj2_m)
    assert bool(jnp.isfinite(out_m)), out_m
    assert abs(float(out_m) - float(ref_m)) <= 5e-3 * max(1.0, abs(float(ref_m))), (out_m, ref_m)

    print("KERNEL_OK")
</pallas_src>

<mosaic_0001>
module attributes {stable_mosaic.version = 11 : i64} {
  func.func @_geodesic_kernel(%arg0: i32, %arg1: memref<4x56x128xf32, #tpu.memory_space<vmem>>, %arg2: memref<4x56x128xf32, #tpu.memory_space<vmem>>, %arg3: memref<8x128xf32, #tpu.memory_space<vmem>>) attributes {dimension_semantics = [#tpu.dimension_semantics<parallel>], iteration_bounds = array<i64: 2>, scalar_prefetch = 0 : i64, scratch_operands = 0 : i64, tpu.core_type = #tpu.core_type<tc>, window_params = [{transform_indices = @transform_0, window_bounds = array<i64: 4, 56, 128>}, {transform_indices = @transform_1, window_bounds = array<i64: 4, 56, 128>}, {transform_indices = @transform_2, window_bounds = array<i64: 8, 128>}]} {
    %cst = arith.constant 0.000000e+00 : f32
    %0 = vector.broadcast %cst : f32 to vector<8x128xf32>
    %c0_i32 = arith.constant 0 : i32
    %c4_i32 = arith.constant 4 : i32
    %1 = arith.addi %c0_i32, %c4_i32 : i32
    %c1_i32 = arith.constant 1 : i32
    %2 = scf.for %arg4 = %c0_i32 to %1 step %c1_i32 iter_args(%arg5 = %0) -> (vector<8x128xf32>)  : i32 {
      %4 = arith.index_cast %arg4 : i32 to index
      %c0_2 = arith.constant 0 : index
      %c0_3 = arith.constant 0 : index
      %5 = vector.load %arg1[%4, %c0_2, %c0_3] : memref<4x56x128xf32, #tpu.memory_space<vmem>>, vector<1x56x128xf32>
      %6 = vector.shape_cast %5 : vector<1x56x128xf32> to vector<56x128xf32>
      %7 = arith.index_cast %arg4 : i32 to index
      %c0_4 = arith.constant 0 : index
      %c0_5 = arith.constant 0 : index
      %8 = vector.load %arg2[%7, %c0_4, %c0_5] : memref<4x56x128xf32, #tpu.memory_space<vmem>>, vector<1x56x128xf32>
      %9 = vector.shape_cast %8 : vector<1x56x128xf32> to vector<56x128xf32>
      %10 = vector.extract_strided_slice %6 {offsets = [0, 0], sizes = [8, 128], strides = [1, 1]} : vector<56x128xf32> to vector<8x128xf32>
      %11 = vector.extract_strided_slice %6 {offsets = [8, 0], sizes = [8, 128], strides = [1, 1]} : vector<56x128xf32> to vector<8x128xf32>
      %12 = vector.extract_strided_slice %6 {offsets = [16, 0], sizes = [8, 128], strides = [1, 1]} : vector<56x128xf32> to vector<8x128xf32>
      %13 = vector.extract_strided_slice %6 {offsets = [24, 0], sizes = [8, 128], strides = [1, 1]} : vector<56x128xf32> to vector<8x128xf32>
      %14 = vector.extract_strided_slice %6 {offsets = [32, 0], sizes = [8, 128], strides = [1, 1]} : vector<56x128xf32> to vector<8x128xf32>
      %15 = vector.extract_strided_slice %6 {offsets = [40, 0], sizes = [8, 128], strides = [1, 1]} : vector<56x128xf32> to vector<8x128xf32>
      %16 = vector.extract_strided_slice %6 {offsets = [48, 0], sizes = [8, 128], strides = [1, 1]} : vector<56x128xf32> to vector<8x128xf32>
      %17 = vector.extract_strided_slice %9 {offsets = [0, 0], sizes = [8, 128], strides = [1, 1]} : vector<56x128xf32> to vector<8x128xf32>
      %18 = vector.extract_strided_slice %9 {offsets = [8, 0], sizes = [8, 128], strides = [1, 1]} : vector<56x128xf32> to vector<8x128xf32>
      %19 = vector.extract_strided_slice %9 {offsets = [16, 0], sizes = [8, 128], strides = [1, 1]} : vector<56x128xf32> to vector<8x128xf32>
      %20 = vector.extract_strided_slice %9 {offsets = [24, 0], sizes = [8, 128], strides = [1, 1]} : vector<56x128xf32> to vector<8x128xf32>
      %21 = vector.extract_strided_slice %9 {offsets = [32, 0], sizes = [8, 128], strides = [1, 1]} : vector<56x128xf32> to vector<8x128xf32>
      %22 = vector.extract_strided_slice %9 {offsets = [40, 0], sizes = [8, 128], strides = [1, 1]} : vector<56x128xf32> to vector<8x128xf32>
      %23 = vector.extract_strided_slice %9 {offsets = [48, 0], sizes = [8, 128], strides = [1, 1]} : vector<56x128xf32> to vector<8x128xf32>
      %cst_6 = arith.constant 0.000000e+00 : f32
      %24 = vector.broadcast %cst_6 : f32 to vector<8x128xf32>
      %25 = arith.subf %24, %20 : vector<8x128xf32>
      %cst_7 = arith.constant 0.000000e+00 : f32
      %26 = vector.broadcast %cst_7 : f32 to vector<8x128xf32>
      %27 = arith.subf %26, %21 : vector<8x128xf32>
      %cst_8 = arith.constant 0.000000e+00 : f32
      %28 = vector.broadcast %cst_8 : f32 to vector<8x128xf32>
      %29 = arith.subf %28, %22 : vector<8x128xf32>
      %30 = arith.mulf %27, %19 : vector<8x128xf32>
      %31 = arith.mulf %29, %18 : vector<8x128xf32>
      %32 = arith.subf %30, %31 : vector<8x128xf32>
      %33 = arith.mulf %29, %17 : vector<8x128xf32>
      %34 = arith.mulf %25, %19 : vector<8x128xf32>
      %35 = arith.subf %33, %34 : vector<8x128xf32>
      %36 = arith.mulf %25, %18 : vector<8x128xf32>
      %37 = arith.mulf %27, %17 : vector<8x128xf32>
      %38 = arith.subf %36, %37 : vector<8x128xf32>
      %39 = arith.mulf %27, %38 : vector<8x128xf32>
      %40 = arith.mulf %29, %35 : vector<8x128xf32>
      %41 = arith.subf %39, %40 : vector<8x128xf32>
      %42 = arith.mulf %29, %32 : vector<8x128xf32>
      %43 = arith.mulf %25, %38 : vector<8x128xf32>
      %44 = arith.subf %42, %43 : vector<8x128xf32>
      %45 = arith.mulf %25, %35 : vector<8x128xf32>
      %46 = arith.mulf %27, %32 : vector<8x128xf32>
      %47 = arith.subf %45, %46 : vector<8x128xf32>
      %48 = arith.mulf %23, %32 : vector<8x128xf32>
      %49 = arith.addf %48, %41 : vector<8x128xf32>
      %cst_9 = arith.constant 2.000000e+00 : f32
      %50 = vector.broadcast %cst_9 : f32 to vector<8x128xf32>
      %51 = arith.mulf %50, %49 : vector<8x128xf32>
      %52 = arith.addf %17, %51 : vector<8x128xf32>
      %53 = arith.mulf %23, %35 : vector<8x128xf32>
      %54 = arith.addf %53, %44 : vector<8x128xf32>
      %cst_10 = arith.constant 2.000000e+00 : f32
      %55 = vector.broadcast %cst_10 : f32 to vector<8x128xf32>
      %56 = arith.mulf %55, %54 : vector<8x128xf32>
      %57 = arith.addf %18, %56 : vector<8x128xf32>
      %58 = arith.mulf %23, %38 : vector<8x128xf32>
      %59 = arith.addf %58, %47 : vector<8x128xf32>
      %cst_11 = arith.constant 2.000000e+00 : f32
      %60 = vector.broadcast %cst_11 : f32 to vector<8x128xf32>
      %61 = arith.mulf %60, %59 : vector<8x128xf32>
      %62 = arith.addf %19, %61 : vector<8x128xf32>
      %cst_12 = arith.constant 0.000000e+00 : f32
      %63 = vector.broadcast %cst_12 : f32 to vector<8x128xf32>
      %64 = arith.subf %63, %52 : vector<8x128xf32>
      %cst_13 = arith.constant 0.000000e+00 : f32
      %65 = vector.broadcast %cst_13 : f32 to vector<8x128xf32>
      %66 = arith.subf %65, %57 : vector<8x128xf32>
      %cst_14 = arith.constant 0.000000e+00 : f32
      %67 = vector.broadcast %cst_14 : f32 to vector<8x128xf32>
      %68 = arith.subf %67, %62 : vector<8x128xf32>
      %69 = arith.mulf %14, %68 : vector<8x128xf32>
      %70 = arith.mulf %15, %66 : vector<8x128xf32>
      %71 = arith.subf %69, %70 : vector<8x128xf32>
      %72 = arith.mulf %15, %64 : vector<8x128xf32>
      %73 = arith.mulf %13, %68 : vector<8x128xf32>
      %74 = arith.subf %72, %73 : vector<8x128xf32>
      %75 = arith.mulf %13, %66 : vector<8x128xf32>
      %76 = arith.mulf %14, %64 : vector<8x128xf32>
      %77 = arith.subf %75, %76 : vector<8x128xf32>
      %78 = arith.mulf %14, %77 : vector<8x128xf32>
      %79 = arith.mulf %15, %74 : vector<8x128xf32>
      %80 = arith.subf %78, %79 : vector<8x128xf32>
      %81 = arith.mulf %15, %71 : vector<8x128xf32>
      %82 = arith.mulf %13, %77 : vector<8x128xf32>
      %83 = arith.subf %81, %82 : vector<8x128xf32>
      %84 = arith.mulf %13, %74 : vector<8x128xf32>
      %85 = arith.mulf %14, %71 : vector<8x128xf32>
      %86 = arith.subf %84, %85 : vector<8x128xf32>
      %87 = arith.mulf %16, %71 : vector<8x128xf32>
      %88 = arith.addf %87, %80 : vector<8x128xf32>
      %cst_15 = arith.constant 2.000000e+00 : f32
      %89 = vector.broadcast %cst_15 : f32 to vector<8x128xf32>
      %90 = arith.mulf %89, %88 : vector<8x128xf32>
      %91 = arith.addf %64, %90 : vector<8x128xf32>
      %92 = arith.mulf %16, %74 : vector<8x128xf32>
      %93 = arith.addf %92, %83 : vector<8x128xf32>
      %cst_16 = arith.constant 2.000000e+00 : f32
      %94 = vector.broadcast %cst_16 : f32 to vector<8x128xf32>
      %95 = arith.mulf %94, %93 : vector<8x128xf32>
      %96 = arith.addf %66, %95 : vector<8x128xf32>
      %97 = arith.mulf %16, %77 : vector<8x128xf32>
      %98 = arith.addf %97, %86 : vector<8x128xf32>
      %cst_17 = arith.constant 2.000000e+00 : f32
      %99 = vector.broadcast %cst_17 : f32 to vector<8x128xf32>
      %100 = arith.mulf %99, %98 : vector<8x128xf32>
      %101 = arith.addf %68, %100 : vector<8x128xf32>
      %102 = arith.addf %10, %91 : vector<8x128xf32>
      %103 = arith.addf %11, %96 : vector<8x128xf32>
      %104 = arith.addf %12, %101 : vector<8x128xf32>
      %105 = arith.mulf %16, %23 : vector<8x128xf32>
      %106 = arith.mulf %13, %25 : vector<8x128xf32>
      %107 = arith.subf %105, %106 : vector<8x128xf32>
      %108 = arith.mulf %14, %27 : vector<8x128xf32>
      %109 = arith.subf %107, %108 : vector<8x128xf32>
      %110 = arith.mulf %15, %29 : vector<8x128xf32>
      %111 = arith.subf %109, %110 : vector<8x128xf32>
      %112 = arith.mulf %16, %25 : vector<8x128xf32>
      %113 = arith.mulf %13, %23 : vector<8x128xf32>
      %114 = arith.addf %112, %113 : vector<8x128xf32>
      %115 = arith.mulf %14, %29 : vector<8x128xf32>
      %116 = arith.addf %114, %115 : vector<8x128xf32>
      %117 = arith.mulf %15, %27 : vector<8x128xf32>
      %118 = arith.subf %116, %117 : vector<8x128xf32>
      %119 = arith.mulf %16, %27 : vector<8x128xf32>
      %120 = arith.mulf %13, %29 : vector<8x128xf32>
      %121 = arith.subf %119, %120 : vector<8x128xf32>
      %122 = arith.mulf %14, %23 : vector<8x128xf32>
      %123 = arith.addf %121, %122 : vector<8x128xf32>
      %124 = arith.mulf %15, %25 : vector<8x128xf32>
      %125 = arith.addf %123, %124 : vector<8x128xf32>
      %126 = arith.mulf %16, %29 : vector<8x128xf32>
      %127 = arith.mulf %13, %27 : vector<8x128xf32>
      %128 = arith.addf %126, %127 : vector<8x128xf32>
      %129 = arith.mulf %14, %25 : vector<8x128xf32>
      %130 = arith.subf %128, %129 : vector<8x128xf32>
      %131 = arith.mulf %15, %23 : vector<8x128xf32>
      %132 = arith.addf %130, %131 : vector<8x128xf32>
      %cst_18 = arith.constant 0.000000e+00 : f32
      %133 = vector.broadcast %cst_18 : f32 to vector<8x128xf32>
      %134 = arith.cmpf olt, %111, %133 : vector<8x128xf32>
      %cst_19 = arith.constant -1.000000e+00 : f32
      %cst_20 = arith.constant 1.000000e+00 : f32
      %135 = vector.broadcast %cst_19 : f32 to vector<8x128xf32>
      %136 = vector.broadcast %cst_20 : f32 to vector<8x128xf32>
      %137 = arith.select %134, %135, %136 : vector<8x128xi1>, vector<8x128xf32>
      %138 = math.absf %111 : vector<8x128xf32>
      %139 = arith.mulf %118, %118 : vector<8x128xf32>
      %140 = arith.mulf %125, %125 : vector<8x128xf32>
      %141 = arith.addf %139, %140 : vector<8x128xf32>
      %142 = arith.mulf %132, %132 : vector<8x128xf32>
      %143 = arith.addf %141, %142 : vector<8x128xf32>
      %144 = math.sqrt %143 : vector<8x128xf32>
      %cst_21 = arith.constant 1.000000e-30 : f32
      %145 = vector.broadcast %cst_21 : f32 to vector<8x128xf32>
      %146 = arith.maximumf %138, %145 : vector<8x128xf32>
      %147 = tpu.reciprocal %146 {approx = true} : vector<8x128xf32> -> vector<8x128xf32>
      %148 = arith.mulf %144, %147 : vector<8x128xf32>
      %cst_22 = arith.constant 2.41421366 : f32
      %149 = vector.broadcast %cst_22 : f32 to vector<8x128xf32>
      %150 = arith.cmpf ogt, %148, %149 : vector<8x128xf32>
      %cst_23 = arith.constant 0.414213568 : f32
      %151 = vector.broadcast %cst_23 : f32 to vector<8x128xf32>
      %152 = arith.cmpf ogt, %148, %151 : vector<8x128xf32>
      %cst_24 = arith.constant 1.000000e-30 : f32
      %153 = vector.broadcast %cst_24 : f32 to vector<8x128xf32>
      %154 = arith.maximumf %148, %153 : vector<8x128xf32>
      %155 = tpu.reciprocal %154 {approx = true} : vector<8x128xf32> -> vector<8x128xf32>
      %cst_25 = arith.constant 0.000000e+00 : f32
      %156 = vector.broadcast %cst_25 : f32 to vector<8x128xf32>
      %157 = arith.subf %156, %155 : vector<8x128xf32>
      %cst_26 = arith.constant 1.000000e+00 : f32
      %158 = vector.broadcast %cst_26 : f32 to vector<8x128xf32>
      %159 = arith.subf %148, %158 : vector<8x128xf32>
      %cst_27 = arith.constant 1.000000e+00 : f32
      %160 = vector.broadcast %cst_27 : f32 to vector<8x128xf32>
      %161 = arith.addf %148, %160 : vector<8x128xf32>
      %162 = tpu.reciprocal %161 {approx = true} : vector<8x128xf32> -> vector<8x128xf32>
      %163 = arith.mulf %159, %162 : vector<8x128xf32>
      %164 = arith.select %152, %163, %148 : vector<8x128xi1>, vector<8x128xf32>
      %165 = arith.select %150, %157, %164 : vector<8x128xi1>, vector<8x128xf32>
      %cst_28 = arith.constant 0.785398185 : f32
      %cst_29 = arith.constant 0.000000e+00 : f32
      %166 = vector.broadcast %cst_28 : f32 to vector<8x128xf32>
      %167 = vector.broadcast %cst_29 : f32 to vector<8x128xf32>
      %168 = arith.select %150, %166, %167 : vector<8x128xi1>, vector<8x128xf32>
      %cst_30 = arith.constant 0.785398185 : f32
      %cst_31 = arith.constant 0.000000e+00 : f32
      %169 = vector.broadcast %cst_30 : f32 to vector<8x128xf32>
      %170 = vector.broadcast %cst_31 : f32 to vector<8x128xf32>
      %171 = arith.select %152, %169, %170 : vector<8x128xi1>, vector<8x128xf32>
      %172 = arith.addf %168, %171 : vector<8x128xf32>
      %173 = arith.mulf %165, %165 : vector<8x128xf32>
      %cst_32 = arith.constant 0.0805374458 : f32
      %174 = vector.broadcast %cst_32 : f32 to vector<8x128xf32>
      %175 = arith.mulf %174, %173 : vector<8x128xf32>
      %cst_33 = arith.constant 0.138776854 : f32
      %176 = vector.broadcast %cst_33 : f32 to vector<8x128xf32>
      %177 = arith.subf %175, %176 : vector<8x128xf32>
      %178 = arith.mulf %177, %173 : vector<8x128xf32>
      %cst_34 = arith.constant 0.199777111 : f32
      %179 = vector.broadcast %cst_34 : f32 to vector<8x128xf32>
      %180 = arith.addf %178, %179 : vector<8x128xf32>
      %181 = arith.mulf %180, %173 : vector<8x128xf32>
      %cst_35 = arith.constant 0.333329499 : f32
      %182 = vector.broadcast %cst_35 : f32 to vector<8x128xf32>
      %183 = arith.subf %181, %182 : vector<8x128xf32>
      %184 = arith.mulf %183, %173 : vector<8x128xf32>
      %185 = arith.mulf %184, %165 : vector<8x128xf32>
      %186 = arith.addf %185, %165 : vector<8x128xf32>
      %187 = arith.addf %172, %186 : vector<8x128xf32>
      %cst_36 = arith.constant 2.000000e+00 : f32
      %188 = vector.broadcast %cst_36 : f32 to vector<8x128xf32>
      %189 = arith.mulf %188, %187 : vector<8x128xf32>
      %cst_37 = arith.constant 9.99999996E-13 : f32
      %190 = vector.broadcast %cst_37 : f32 to vector<8x128xf32>
      %191 = arith.maximumf %144, %190 : vector<8x128xf32>
      %192 = tpu.reciprocal %191 {approx = true} : vector<8x128xf32> -> vector<8x128xf32>
      %cst_38 = arith.constant 1.000000e-07 : f32
      %193 = vector.broadcast %cst_38 : f32 to vector<8x128xf32>
      %194 = arith.cmpf olt, %144, %193 : vector<8x128xf32>
      %cst_39 = arith.constant 2.000000e+00 : f32
      %195 = vector.broadcast %cst_39 : f32 to vector<8x128xf32>
      %196 = arith.mulf %195, %147 : vector<8x128xf32>
      %197 = arith.mulf %189, %192 : vector<8x128xf32>
      %198 = arith.select %194, %196, %197 : vector<8x128xi1>, vector<8x128xf32>
      %199 = arith.mulf %137, %198 : vector<8x128xf32>
      %200 = arith.mulf %199, %118 : vector<8x128xf32>
      %201 = arith.mulf %199, %125 : vector<8x128xf32>
      %202 = arith.mulf %199, %132 : vector<8x128xf32>
      %203 = arith.mulf %189, %189 : vector<8x128xf32>
      %cst_40 = arith.constant 9.99999996E-13 : f32
      %204 = vector.broadcast %cst_40 : f32 to vector<8x128xf32>
      %205 = arith.maximumf %203, %204 : vector<8x128xf32>
      %cst_41 = arith.constant 1.000000e+00 : f32
      %206 = vector.broadcast %cst_41 : f32 to vector<8x128xf32>
      %207 = arith.divf %206, %205 : vector<8x128xf32>
      %208 = arith.mulf %189, %144 : vector<8x128xf32>
      %cst_42 = arith.constant 9.99999996E-13 : f32
      %209 = vector.broadcast %cst_42 : f32 to vector<8x128xf32>
      %210 = arith.maximumf %208, %209 : vector<8x128xf32>
      %cst_43 = arith.constant 2.000000e+00 : f32
      %211 = vector.broadcast %cst_43 : f32 to vector<8x128xf32>
      %212 = arith.mulf %211, %210 : vector<8x128xf32>
      %213 = arith.divf %138, %212 : vector<8x128xf32>
      %214 = arith.subf %207, %213 : vector<8x128xf32>
      %cst_44 = arith.constant 0.00138888892 : f32
      %215 = vector.broadcast %cst_44 : f32 to vector<8x128xf32>
      %216 = arith.mulf %203, %215 : vector<8x128xf32>
      %cst_45 = arith.constant 0.0833333358 : f32
      %217 = vector.broadcast %cst_45 : f32 to vector<8x128xf32>
      %218 = arith.addf %217, %216 : vector<8x128xf32>
      %219 = arith.mulf %203, %203 : vector<8x128xf32>
      %cst_46 = arith.constant 3.30687835E-5 : f32
      %220 = vector.broadcast %cst_46 : f32 to vector<8x128xf32>
      %221 = arith.mulf %219, %220 : vector<8x128xf32>
      %222 = arith.addf %218, %221 : vector<8x128xf32>
      %cst_47 = arith.constant 5.000000e-01 : f32
      %223 = vector.broadcast %cst_47 : f32 to vector<8x128xf32>
      %224 = arith.cmpf olt, %189, %223 : vector<8x128xf32>
      %225 = arith.select %224, %222, %214 : vector<8x128xi1>, vector<8x128xf32>
      %226 = arith.mulf %201, %104 : vector<8x128xf32>
      %227 = arith.mulf %202, %103 : vector<8x128xf32>
      %228 = arith.subf %226, %227 : vector<8x128xf32>
      %229 = arith.mulf %202, %102 : vector<8x128xf32>
      %230 = arith.mulf %200, %104 : vector<8x128xf32>
      %231 = arith.subf %229, %230 : vector<8x128xf32>
      %232 = arith.mulf %200, %103 : vector<8x128xf32>
      %233 = arith.mulf %201, %102 : vector<8x128xf32>
      %234 = arith.subf %232, %233 : vector<8x128xf32>
      %235 = arith.mulf %201, %234 : vector<8x128xf32>
      %236 = arith.mulf %202, %231 : vector<8x128xf32>
      %237 = arith.subf %235, %236 : vector<8x128xf32>
      %238 = arith.mulf %202, %228 : vector<8x128xf32>
      %239 = arith.mulf %200, %234 : vector<8x128xf32>
      %240 = arith.subf %238, %239 : vector<8x128xf32>
      %241 = arith.mulf %200, %231 : vector<8x128xf32>
      %242 = arith.mulf %201, %228 : vector<8x128xf32>
      %243 = arith.subf %241, %242 : vector<8x128xf32>
      %cst_48 = arith.constant 5.000000e-01 : f32
      %244 = vector.broadcast %cst_48 : f32 to vector<8x128xf32>
      %245 = arith.mulf %244, %228 : vector<8x128xf32>
      %246 = arith.subf %102, %245 : vector<8x128xf32>
      %247 = arith.mulf %225, %237 : vector<8x128xf32>
      %248 = arith.addf %246, %247 : vector<8x128xf32>
      %cst_49 = arith.constant 5.000000e-01 : f32
      %249 = vector.broadcast %cst_49 : f32 to vector<8x128xf32>
      %250 = arith.mulf %249, %231 : vector<8x128xf32>
      %251 = arith.subf %103, %250 : vector<8x128xf32>
      %252 = arith.mulf %225, %240 : vector<8x128xf32>
      %253 = arith.addf %251, %252 : vector<8x128xf32>
      %cst_50 = arith.constant 5.000000e-01 : f32
      %254 = vector.broadcast %cst_50 : f32 to vector<8x128xf32>
      %255 = arith.mulf %254, %234 : vector<8x128xf32>
      %256 = arith.subf %104, %255 : vector<8x128xf32>
      %257 = arith.mulf %225, %243 : vector<8x128xf32>
      %258 = arith.addf %256, %257 : vector<8x128xf32>
      %259 = arith.mulf %248, %248 : vector<8x128xf32>
      %260 = arith.mulf %253, %253 : vector<8x128xf32>
      %261 = arith.addf %259, %260 : vector<8x128xf32>
      %262 = arith.mulf %258, %258 : vector<8x128xf32>
      %263 = arith.addf %261, %262 : vector<8x128xf32>
      %264 = arith.mulf %200, %200 : vector<8x128xf32>
      %265 = arith.addf %263, %264 : vector<8x128xf32>
      %266 = arith.mulf %201, %201 : vector<8x128xf32>
      %267 = arith.addf %265, %266 : vector<8x128xf32>
      %268 = arith.mulf %202, %202 : vector<8x128xf32>
      %269 = arith.addf %267, %268 : vector<8x128xf32>
      %270 = arith.addf %arg5, %269 : vector<8x128xf32>
      scf.yield %270 : vector<8x128xf32>
    }
    %c4_i32_0 = arith.constant 4 : i32
    %c0 = arith.constant 0 : index
    %c0_1 = arith.constant 0 : index
    %3 = vector.load %arg3[%c0, %c0_1] : memref<8x128xf32, #tpu.memory_space<vmem>>, vector<8x128xf32>
    tpu.vector_store %arg3[%c0, %c0_1], %2 {strides = array<i32>} : memref<8x128xf32, #tpu.memory_space<vmem>>, vector<8x128xf32>,
    return
  }
  func.func @transform_0(%arg0: i32) -> (i32, i32, i32) {
    %c0_i32 = arith.constant 0 : i32
    %c0_i32_0 = arith.constant 0 : i32
    %c0_i32_1 = arith.constant 0 : i32
    return %arg0, %c0_i32, %c0_i32_0 : i32, i32, i32
  }
  func.func @transform_1(%arg0: i32) -> (i32, i32, i32) {
    %c0_i32 = arith.constant 0 : i32
    %c0_i32_0 = arith.constant 0 : i32
    %c0_i32_1 = arith.constant 0 : i32
    return %arg0, %c0_i32, %c0_i32_0 : i32, i32, i32
  }
  func.func @transform_2(%arg0: i32) -> (i32, i32) {
    %c0_i32 = arith.constant 0 : i32
    %c0_i32_0 = arith.constant 0 : i32
    return %arg0, %c0_i32 : i32, i32
  }
}

</mosaic_0001>

<llo_original>
// kernel: tpu_custom_call.1
$region0: #{tpu_custom_call.1}
  #allocation0 [shape = 'u32[]', space=smem, size = 0x4, offset = 0x4, fixed_abs, tag = 'smem constant byte address 0x4 - core index']
  #allocation1 [shape = 'u32[144,128]{1,0:T(1,128)}', space=vmem, size = 0x12000, scoped, tag = 'internal scratch']
  %s0 = inlined_call_operand.hbm [shape: f32[8,56,128], index: 0, kind: input, shape index: {}]
  %s1 = inlined_call_operand.hbm [shape: f32[8,56,128], index: 1, kind: input, shape index: {}]
  %s2 = inlined_call_operand.hbm [shape: f32[16,128], index: 2, kind: output, shape index: {}]
  %s3 = sld [smem:[#allocation0]]
  $region56: #{tpu_custom_call.1} parent=0
    _
  %s5 = ssub.s32 1, %s3
  %s6 = scalar_select 0, %s5, %s3
  $region1: #{tpu_custom_call.1} parent=0
    #allocation2 [shape = 'u8[229376]{0}', space=vmem, size = 0x38000, scoped, tag = 'input window, operand 0']
    #allocation3 [shape = 's32[2]{0}', space=sflag, size = 0x8, scoped, tag = 'scoped memory for tpu_custom_call.1']
    #allocation4 [shape = 's32[2]{0}', space=sflag, size = 0x8, scoped, tag = 'scoped memory for tpu_custom_call.1']
    #allocation5 [shape = 'u8[229376]{0}', space=vmem, size = 0x38000, scoped, tag = 'input window, operand 1']
    #allocation6 [shape = 's32[2]{0}', space=sflag, size = 0x8, scoped, tag = 'scoped memory for tpu_custom_call.1']
    #allocation7 [shape = 'u8[8192]{0}', space=vmem, size = 0x2000, scoped, tag = 'output window, operand 0']
    %7 = vsyncpa [#allocation3], 0
    %s8 = scalar_lea.sflag [#allocation3], 1
    %9 = vsyncpa %s8, 0
    %10 = vsyncpa [#allocation6], 0
    %s11 = scalar_lea.sflag [#allocation6], 1
    %12 = vsyncpa %s11, 0
    %13 = vsyncpa [#allocation4], 0
    %s14 = scalar_lea.sflag [#allocation4], 1
    %15 = vsyncpa %s14, 0
    loop: start=0, step=1, limit=4
    $region2: #{tpu_custom_call.1} parent=1 // loop_pre_header
      _
    $region3: #{tpu_custom_call.1} parent=1 // loop_header
      %s17 = sphi 0, %s21
      %p18 = scmp.ge.s32.totalorder %s17, 4
      %s27 = sphi 0, %s29
      %s30 = sphi 0, %s27
      %s31 = sphi 0, %s30
      %s47 = sphi 0, %s31
      %s53 = sphi 0, %s55
      %s56 = sphi 0, %s53
      %s57 = sphi 0, %s56
      %s73 = sphi 0, %s57
      %s79 = sphi 0, %s81
      %s82 = sphi 0, %s79
      %s83 = sphi 0, %s82
      %s99 = sphi 0, %s83
    $region4: #{tpu_custom_call.1} parent=1 // loop_header_branch
      %20 = sbr.rel (%p18) target = $region8
    $region5: #{tpu_custom_call.1} parent=1 // loop_body
      %s22 = ssub.s32 %s17, 1
      %s23 = ssub.s32 %s17, 2
      %s24 = sadd.s32 %s17, 1
      %s25 = ssub.s32 %s17, %s24
      %p26 = scmp.eq.s32.totalorder %s25, 0
      %s28 = sadd.s32 %s27, 1
      %s29 = scalar_select %p26, %s27, %s28
      %p32 = pneg %p26
      %p33 = scmp.eq.s32.totalorder %s17, 1
      %p34 = por %p32, %p33
      %p35 = scmp.ne.s32.totalorder %s27, %s30
      %p36 = scmp.eq.s32.totalorder %s17, 0
      %p37 = por %p35, %p36
      %p38 = scmp.ne.s32.totalorder %s27, %s30
      %p39 = scmp.eq.s32.totalorder %s22, 1
      %p40 = por %p38, %p39
      %p41 = scmp.ne.s32.totalorder %s30, %s31
      %p42 = scmp.eq.s32.totalorder %s22, 0
      %p43 = por %p41, %p42
      %p44 = scmp.ne.s32.totalorder %s30, %s31
      %p45 = scmp.eq.s32.totalorder %s23, 1
      %p46 = por %p44, %p45
      %p48 = scmp.ne.s32.totalorder %s31, %s47
      %p49 = scmp.eq.s32.totalorder %s23, 0
      %p50 = por %p48, %p49
      %s51 = ssub.s32 %s17, %s24
      %p52 = scmp.eq.s32.totalorder %s51, 0
      %s54 = sadd.s32 %s53, 1
      %s55 = scalar_select %p52, %s53, %s54
      %p58 = pneg %p52
      %p59 = scmp.eq.s32.totalorder %s17, 1
      %p60 = por %p58, %p59
      %p61 = scmp.ne.s32.totalorder %s53, %s56
      %p62 = scmp.eq.s32.totalorder %s17, 0
      %p63 = por %p61, %p62
      %p64 = scmp.ne.s32.totalorder %s53, %s56
      %p65 = scmp.eq.s32.totalorder %s22, 1
      %p66 = por %p64, %p65
      %p67 = scmp.ne.s32.totalorder %s56, %s57
      %p68 = scmp.eq.s32.totalorder %s22, 0
      %p69 = por %p67, %p68
      %p70 = scmp.ne.s32.totalorder %s56, %s57
      %p71 = scmp.eq.s32.totalorder %s23, 1
      %p72 = por %p70, %p71
      %p74 = scmp.ne.s32.totalorder %s57, %s73
      %p75 = scmp.eq.s32.totalorder %s23, 0
      %p76 = por %p74, %p75
      %s77 = ssub.s32 %s17, %s24
      %p78 = scmp.eq.s32.totalorder %s77, 0
      %s80 = sadd.s32 %s79, 1
      %s81 = scalar_select %p78, %s79, %s80
      %p84 = pneg %p78
      %p85 = scmp.eq.s32.totalorder %s17, 1
      %p86 = por %p84, %p85
      %p87 = scmp.ne.s32.totalorder %s79, %s82
      %p88 = scmp.eq.s32.totalorder %s17, 0
      %p89 = por %p87, %p88
      %p90 = scmp.ne.s32.totalorder %s79, %s82
      %p91 = scmp.eq.s32.totalorder %s22, 1
      %p92 = por %p90, %p91
      %p93 = scmp.ne.s32.totalorder %s82, %s83
      %p94 = scmp.eq.s32.totalorder %s22, 0
      %p95 = por %p93, %p94
      %p96 = scmp.ne.s32.totalorder %s82, %s83
      %p97 = scmp.eq.s32.totalorder %s23, 1
      %p98 = por %p96, %p97
      %p100 = scmp.ne.s32.totalorder %s83, %s99
      %p101 = scmp.eq.s32.totalorder %s23, 0
      %p102 = por %p100, %p101
      %p103 = scmp.le.s32.totalorder 1, %s17
      %p104 = scmp.lt.s32.totalorder %s17, 3
      %p105 = pnand %p103, %p104
      %p106 = pneg %p105
      // Predicated region
      $region9: #{tpu_custom_call.1} parent=5 // pred_check
        _
      $region10: #{tpu_custom_call.1} parent=5 // pred_check_branch
        %108 = sbr.rel (%p105) target = $region12
      $region11: #{tpu_custom_call.1} parent=5 // pred_region
        %s109 = ssub.s32 %s17, 1
      $region12: #{tpu_custom_call.1} parent=5 // pred_fallthru
        _
      %p110 = scmp.lt.s32.totalorder %s17, 2
      // Predicated region
      $region13: #{tpu_custom_call.1} parent=5 // pred_check
        %p111 = pneg %p110
      $region14: #{tpu_custom_call.1} parent=5 // pred_check_branch
        %113 = sbr.rel (%p111) target = $region16
      $region15: #{tpu_custom_call.1} parent=5 // pred_region
        // Predicated region
        $region17: #{tpu_custom_call.1} parent=15 // pred_check
          %p114 = pneg %p37
        $region18: #{tpu_custom_call.1} parent=15 // pred_check_branch
          %116 = sbr.rel (%p114) target = $region20
        $region19: #{tpu_custom_call.1} parent=15 // pred_region
          %s117 = sand.u32 %s27, 1
          %s118 = scalar_lea.sflag [#allocation3], %s117
          %s119 = sand.u32 %s27, 1
          %s120 = smul.addr %s119, 224
          %s121 = scalar_lea.vmem [#allocation2], %s120
          %s122 = smul.u32 4, %s17
          %s124 = ssub.s32 3584, 3584
          %125 = vsyncadd %s118, %s124
          %s126 = smul.addr %s122, 7
          %s127 = smul.addr %s126, 128
          %s128 = scalar_lea.hbm %s0, %s127
          %s129 = sshll.u32 %s121, 4
          %s130 = int_to_ptr.vmem [resolvable:$true] %s129
          %135 = dma.hbm_to_vmem [thread:$0]  %s128, 3584, %s130, %s118, 128, 128, 8
        $region20: #{tpu_custom_call.1} parent=15 // pred_fallthru
          _
        // Predicated region
        $region21: #{tpu_custom_call.1} parent=15 // pred_check
          %p136 = pneg %p63
        $region22: #{tpu_custom_call.1} parent=15 // pred_check_branch
          %138 = sbr.rel (%p136) target = $region24
        $region23: #{tpu_custom_call.1} parent=15 // pred_region
          %s139 = sand.u32 %s53, 1
          %s140 = scalar_lea.sflag [#allocation6], %s139
          %s141 = sand.u32 %s53, 1
          %s142 = smul.addr %s141, 224
          %s143 = scalar_lea.vmem [#allocation5], %s142
          %s144 = smul.u32 4, %s17
          %s146 = ssub.s32 3584, 3584
          %147 = vsyncadd %s140, %s146
          %s148 = smul.addr %s144, 7
          %s149 = smul.addr %s148, 128
          %s150 = scalar_lea.hbm %s1, %s149
          %s151 = sshll.u32 %s143, 4
          %s152 = int_to_ptr.vmem [resolvable:$true] %s151
          %157 = dma.hbm_to_vmem [thread:$0]  %s150, 3584, %s152, %s140, 128, 128, 8
        $region24: #{tpu_custom_call.1} parent=15 // pred_fallthru
          _
      $region16: #{tpu_custom_call.1} parent=5 // pred_fallthru
        _
      %p158 = scmp.le.s32.totalorder 1, %s17
      %p159 = scmp.lt.s32.totalorder %s17, 3
      %p160 = pnand %p158, %p159
      %p161 = pneg %p160
      // Predicated region
      $region25: #{tpu_custom_call.1} parent=5 // pred_check
        _
      $region26: #{tpu_custom_call.1} parent=5 // pred_check_branch
        %163 = sbr.rel (%p160) target = $region28
      $region27: #{tpu_custom_call.1} parent=5 // pred_region
        %s164 = ssub.s32 %s17, 1
        %s165 = sand.u32 %s30, 1
        %s166 = scalar_lea.sflag [#allocation3], %s165
        %s167 = sand.u32 %s30, 1
        %s168 = smul.addr %s167, 224
        %s169 = scalar_lea.vmem [#allocation2], %s168
        // Predicated region
        $region29: #{tpu_custom_call.1} parent=27 // pred_check
          %p170 = pneg %p43
        $region30: #{tpu_custom_call.1} parent=27 // pred_check_branch
          %172 = sbr.rel (%p170) target = $region32
        $region31: #{tpu_custom_call.1} parent=27 // pred_region
          %173 = dma.done %s166, 3584
        $region32: #{tpu_custom_call.1} parent=27 // pred_fallthru
          _
        %s174 = sand.u32 %s56, 1
        %s175 = scalar_lea.sflag [#allocation6], %s174
        %s176 = sand.u32 %s56, 1
        %s177 = smul.addr %s176, 224
        %s178 = scalar_lea.vmem [#allocation5], %s177
        // Predicated region
        $region33: #{tpu_custom_call.1} parent=27 // pred_check
          %p179 = pneg %p69
        $region34: #{tpu_custom_call.1} parent=27 // pred_check_branch
          %181 = sbr.rel (%p179) target = $region36
        $region35: #{tpu_custom_call.1} parent=27 // pred_region
          %182 = dma.done %s175, 3584
        $region36: #{tpu_custom_call.1} parent=27 // pred_fallthru
          _
        %s183 = sand.u32 %s30, 1
        %s184 = scalar_lea.sflag [#allocation3], %s183
        %s185 = sand.u32 %s30, 1
        %s186 = smul.addr %s185, 224
        %s187 = scalar_lea.vmem [#allocation2], %s186
        %p188 = pneg %p43
        %p189 = pneg %p40
        %s190 = sand.u32 %s56, 1
        %s191 = scalar_lea.sflag [#allocation6], %s190
        %s192 = sand.u32 %s56, 1
        %s193 = smul.addr %s192, 224
        %s194 = scalar_lea.vmem [#allocation5], %s193
        %p195 = pneg %p69
        %p196 = pneg %p66
        %p197 = pneg %p95
        %p198 = pneg %p92
        %s199 = sand.u32 %s82, 1
        %s200 = scalar_lea.sflag [#allocation4], %s199
        %s201 = sand.u32 %s82, 1
        %s202 = smul.addr %s201, 8
        %s203 = scalar_lea.vmem [#allocation7], %s202
        %s204 = smul.u32 4, %s22
        %s205 = smul.u32 4, %s22
        loop: start=0, step=1, limit=4
        $region37: #{tpu_custom_call.1} parent=27 // loop_pre_header
          _
        $region38: #{tpu_custom_call.1} parent=27 // loop_header
          %s207 = sphi 0, %s211
          %p208 = scmp.ge.s32.totalorder %s207, 4
          %v212 = vphi 0.0, %v439
        $region39: #{tpu_custom_call.1} parent=27 // loop_header_branch
          %210 = sbr.rel (%p208) target = $region43
        $region40: #{tpu_custom_call.1} parent=27 // loop_body
          %s213 = smul.u32 %s207, 56
          %s214 = scalar_lea.vmem %s169, %s213 [#allocation2]
          %v215 = vld [vmem:[%s214] sm:$0xff]
          %v216 = vld [vmem:[%s214 + $0x8] sm:$0xff]
          %v217 = vld [vmem:[%s214 + $0x10] sm:$0xff]
          %v218 = vld [vmem:[%s214 + $0x18] sm:$0xff]
          %v219 = vld [vmem:[%s214 + $0x20] sm:$0xff]
          %v220 = vld [vmem:[%s214 + $0x28] sm:$0xff]
          %v221 = vld [vmem:[%s214 + $0x30] sm:$0xff]
          %s222 = scalar_lea.vmem %s178, %s213 [#allocation5]
          %v223 = vld [vmem:[%s222] sm:$0xff]
          %v224 = vld [vmem:[%s222 + $0x8] sm:$0xff]
          %v225 = vld [vmem:[%s222 + $0x10] sm:$0xff]
          %v226 = vld [vmem:[%s222 + $0x18] sm:$0xff]
          %v227 = vld [vmem:[%s222 + $0x20] sm:$0xff]
          %v228 = vld [vmem:[%s222 + $0x28] sm:$0xff]
          %v229 = vld [vmem:[%s222 + $0x30] sm:$0xff]
          %v230 = vsub.f32 0.0, %v226
          %v231 = vsub.f32 0.0, %v227
          %v232 = vsub.f32 0.0, %v228
          %v233 = vmul.f32 %v231, %v225
          %v234 = vmul.f32 %v232, %v224
          %v235 = vsub.f32 %v233, %v234
          %v236 = vmul.f32 %v232, %v223
          %v237 = vmul.f32 %v230, %v225
          %v238 = vsub.f32 %v236, %v237
          %v239 = vmul.f32 %v230, %v224
          %v240 = vmul.f32 %v231, %v223
          %v241 = vsub.f32 %v239, %v240
          %v242 = vmul.f32 %v231, %v241
          %v243 = vmul.f32 %v232, %v238
          %v244 = vsub.f32 %v242, %v243
          %v245 = vmul.f32 %v232, %v235
          %v246 = vmul.f32 %v230, %v241
          %v247 = vsub.f32 %v245, %v246
          %v248 = vmul.f32 %v230, %v238
          %v249 = vmul.f32 %v231, %v235
          %v250 = vsub.f32 %v248, %v249
          %v251 = vmul.f32 %v229, %v235
          %v252 = vadd.f32 %v251, %v244
          %v253 = vmul.f32 %v252, 2.0
          %v254 = vadd.f32 %v223, %v253
          %v255 = vmul.f32 %v229, %v238
          %v256 = vadd.f32 %v255, %v247
          %v257 = vmul.f32 %v256, 2.0
          %v258 = vadd.f32 %v224, %v257
          %v259 = vmul.f32 %v229, %v241
          %v260 = vadd.f32 %v259, %v250
          %v261 = vmul.f32 %v260, 2.0
          %v262 = vadd.f32 %v225, %v261
          %v263 = vsub.f32 0.0, %v254
          %v264 = vsub.f32 0.0, %v258
          %v265 = vsub.f32 0.0, %v262
          %v266 = vmul.f32 %v219, %v265
          %v267 = vmul.f32 %v220, %v264
          %v268 = vsub.f32 %v266, %v267
          %v269 = vmul.f32 %v220, %v263
          %v270 = vmul.f32 %v218, %v265
          %v271 = vsub.f32 %v269, %v270
          %v272 = vmul.f32 %v218, %v264
          %v273 = vmul.f32 %v219, %v263
          %v274 = vsub.f32 %v272, %v273
          %v275 = vmul.f32 %v219, %v274
          %v276 = vmul.f32 %v220, %v271
          %v277 = vsub.f32 %v275, %v276
          %v278 = vmul.f32 %v220, %v268
          %v279 = vmul.f32 %v218, %v274
          %v280 = vsub.f32 %v278, %v279
          %v281 = vmul.f32 %v218, %v271
          %v282 = vmul.f32 %v219, %v268
          %v283 = vsub.f32 %v281, %v282
          %v284 = vmul.f32 %v221, %v268
          %v285 = vadd.f32 %v284, %v277
          %v286 = vmul.f32 %v285, 2.0
          %v287 = vadd.f32 %v263, %v286
          %v288 = vmul.f32 %v221, %v271
          %v289 = vadd.f32 %v288, %v280
          %v290 = vmul.f32 %v289, 2.0
          %v291 = vadd.f32 %v264, %v290
          %v292 = vmul.f32 %v221, %v274
          %v293 = vadd.f32 %v292, %v283
          %v294 = vmul.f32 %v293, 2.0
          %v295 = vadd.f32 %v265, %v294
          %v296 = vadd.f32 %v215, %v287
          %v297 = vadd.f32 %v216, %v291
          %v298 = vadd.f32 %v217, %v295
          %v299 = vmul.f32 %v221, %v229
          %v300 = vmul.f32 %v218, %v230
          %v301 = vsub.f32 %v299, %v300
          %v302 = vmul.f32 %v219, %v231
          %v303 = vsub.f32 %v301, %v302
          %v304 = vmul.f32 %v220, %v232
          %v305 = vsub.f32 %v303, %v304
          %v306 = vmul.f32 %v221, %v230
          %v307 = vmul.f32 %v218, %v229
          %v308 = vadd.f32 %v306, %v307
          %v309 = vmul.f32 %v219, %v232
          %v310 = vadd.f32 %v308, %v309
          %v311 = vmul.f32 %v220, %v231
          %v312 = vsub.f32 %v310, %v311
          %v313 = vmul.f32 %v221, %v231
          %v314 = vmul.f32 %v218, %v232
          %v315 = vsub.f32 %v313, %v314
          %v316 = vmul.f32 %v219, %v229
          %v317 = vadd.f32 %v315, %v316
          %v318 = vmul.f32 %v220, %v230
          %v319 = vadd.f32 %v317, %v318
          %v320 = vmul.f32 %v221, %v232
          %v321 = vmul.f32 %v218, %v231
          %v322 = vadd.f32 %v320, %v321
          %v323 = vmul.f32 %v219, %v230
          %v324 = vsub.f32 %v322, %v323
          %v325 = vmul.f32 %v220, %v229
          %v326 = vadd.f32 %v324, %v325
          %vm327 = vcmp.lt.f32.partialorder %v305, 0.0
          %v328 = vsel %vm327, -1.0, 1.0
          %v329 = vand.u32 2147483647, %v305
          %v330 = vmul.f32 %v312, %v312
          %v331 = vmul.f32 %v319, %v319
          %v332 = vadd.f32 %v330, %v331
          %v333 = vmul.f32 %v326, %v326
          %v334 = vadd.f32 %v332, %v333
          %v335 = vrsqrt.pop %v334
          %v336 = vmul.f32 %v334, %v335
          %vm337 = vcmp.eq.f32.partialorder %v334, inf
          %v338 = vsel %vm337, %v334, %v336
          %vm339 = vcmp.eq.f32.partialorder %v334, 0.0
          %v340 = vand.u32 %v334, 2147483648
          %v341 = vsel %vm339, %v340, %v338
          %v342 = vmax.f32 %v329, 1e-30
          %v343 = vrcp.pop %v342
          %v344 = vmul.f32 %v341, %v343
          %vm345 = vcmp.gt.f32.partialorder %v344, 2.4142137
          %vm346 = vcmp.gt.f32.partialorder %v344, 0.41421357
          %v347 = vmax.f32 %v344, 1e-30
          %v348 = vrcp.pop %v347
          %v349 = vsub.f32 0.0, %v348
          %v350 = vsub.f32 %v344, 1.0
          %v351 = vadd.f32 %v344, 1.0
          %v352 = vrcp.pop %v351
          %v353 = vmul.f32 %v350, %v352
          %v354 = vsel %vm346, %v353, %v344
          %v355 = vsel %vm345, %v349, %v354
          %v356 = vsel %vm345, 0.7853982, 0.0
          %v357 = vsel %vm346, 0.7853982, 0.0
          %v358 = vadd.f32 %v356, %v357
          %v359 = vmul.f32 %v355, %v355
          %v360 = vmul.f32 %v359, 0.080537446
          %v361 = vsub.f32 %v360, 0.13877685
          %v362 = vmul.f32 %v361, %v359
          %v363 = vadd.f32 %v362, 0.19977711
          %v364 = vmul.f32 %v363, %v359
          %v365 = vsub.f32 %v364, 0.3333295
          %v366 = vmul.f32 %v365, %v359
          %v367 = vmul.f32 %v366, %v355
          %v368 = vadd.f32 %v367, %v355
          %v369 = vadd.f32 %v358, %v368
          %v370 = vmul.f32 %v369, 2.0
          %v371 = vmax.f32 %v341, 1e-12
          %v372 = vrcp.pop %v371
          %vm373 = vcmp.lt.f32.partialorder %v341, 1e-07
          %v374 = vmul.f32 %v343, 2.0
          %v375 = vmul.f32 %v370, %v372
          %v376 = vsel %vm373, %v374, %v375
          %v377 = vmul.f32 %v328, %v376
          %v378 = vmul.f32 %v377, %v312
          %v379 = vmul.f32 %v377, %v319
          %v380 = vmul.f32 %v377, %v326
          %v381 = vmul.f32 %v370, %v370
          %v382 = vmax.f32 %v381, 1e-12
          %v383 = vrcp.pop %v382
          %v384 = vmul.f32 1.0, %v383
          %v385 = vmul.f32 %v370, %v341
          %v386 = vmax.f32 %v385, 1e-12
          %v387 = vmul.f32 %v386, 2.0
          %v388 = vrcp.pop %v387
          %v389 = vmul.f32 %v329, %v388
          %v390 = vsub.f32 %v384, %v389
          %v391 = vmul.f32 %v381, 0.0013888889
          %v392 = vadd.f32 %v391, 0.083333336
          %v393 = vmul.f32 %v381, %v381
          %v394 = vmul.f32 %v393, 3.3068784e-05
          %v395 = vadd.f32 %v392, %v394
          %vm396 = vcmp.lt.f32.partialorder %v370, 0.5
          %v397 = vsel %vm396, %v395, %v390
          %v398 = vmul.f32 %v379, %v298
          %v399 = vmul.f32 %v380, %v297
          %v400 = vsub.f32 %v398, %v399
          %v401 = vmul.f32 %v380, %v296
          %v402 = vmul.f32 %v378, %v298
          %v403 = vsub.f32 %v401, %v402
          %v404 = vmul.f32 %v378, %v297
          %v405 = vmul.f32 %v379, %v296
          %v406 = vsub.f32 %v404, %v405
          %v407 = vmul.f32 %v379, %v406
          %v408 = vmul.f32 %v380, %v403
          %v409 = vsub.f32 %v407, %v408
          %v410 = vmul.f32 %v380, %v400
          %v411 = vmul.f32 %v378, %v406
          %v412 = vsub.f32 %v410, %v411
          %v413 = vmul.f32 %v378, %v403
          %v414 = vmul.f32 %v379, %v400
          %v415 = vsub.f32 %v413, %v414
          %v416 = vmul.f32 %v400, 0.5
          %v417 = vsub.f32 %v296, %v416
          %v418 = vmul.f32 %v397, %v409
          %v419 = vadd.f32 %v417, %v418
          %v420 = vmul.f32 %v403, 0.5
          %v421 = vsub.f32 %v297, %v420
          %v422 = vmul.f32 %v397, %v412
          %v423 = vadd.f32 %v421, %v422
          %v424 = vmul.f32 %v406, 0.5
          %v425 = vsub.f32 %v298, %v424
          %v426 = vmul.f32 %v397, %v415
          %v427 = vadd.f32 %v425, %v426
          %v428 = vmul.f32 %v419, %v419
          %v429 = vmul.f32 %v423, %v423
          %v430 = vadd.f32 %v428, %v429
          %v431 = vmul.f32 %v427, %v427
          %v432 = vadd.f32 %v430, %v431
          %v433 = vmul.f32 %v378, %v378
          %v434 = vadd.f32 %v432, %v433
          %v435 = vmul.f32 %v379, %v379
          %v436 = vadd.f32 %v434, %v435
          %v437 = vmul.f32 %v380, %v380
          %v438 = vadd.f32 %v436, %v437
          %v439 = vadd.f32 %v212, %v438
        $region41: #{tpu_custom_call.1} parent=27 // loop_footer
          %s211 = sadd.s32 1, %s207
        $region42: #{tpu_custom_call.1} parent=27 // loop_footer_branch
          %206 = sbr.rel target = $region38
        $region43: #{tpu_custom_call.1} parent=27 // loop_exit
          _
        %440 = vst [vmem:[%s203] sm:$0xff] %v212
        %s441 = sand.u32 %s82, 1
        %s442 = scalar_lea.sflag [#allocation4], %s441
        %s443 = sand.u32 %s82, 1
        %s444 = smul.addr %s443, 8
        %s445 = scalar_lea.vmem [#allocation7], %s444
        // Predicated region
        $region44: #{tpu_custom_call.1} parent=27 // pred_check
          %p446 = pneg %p92
        $region45: #{tpu_custom_call.1} parent=27 // pred_check_branch
          %448 = sbr.rel (%p446) target = $region47
        $region46: #{tpu_custom_call.1} parent=27 // pred_region
          %s450 = ssub.s32 128, 128
          %451 = vsyncadd %s442, %s450
          %s452 = smul.addr %s22, 128
          %s453 = scalar_lea.hbm %s2, %s452
          %s455 = sshll.u32 %s445, 4
          %s456 = int_to_ptr.vmem [resolvable:$true] %s455
          %458 = dma.vmem_to_hbm [thread:$0]  %s456, 128, %s453, %s442
        $region47: #{tpu_custom_call.1} parent=27 // pred_fallthru
          _
      $region28: #{tpu_custom_call.1} parent=5 // pred_fallthru
        _
      %p459 = scmp.le.s32.totalorder 2, %s17
      // Predicated region
      $region48: #{tpu_custom_call.1} parent=5 // pred_check
        %p460 = pneg %p459
      $region49: #{tpu_custom_call.1} parent=5 // pred_check_branch
        %462 = sbr.rel (%p460) target = $region51
      $region50: #{tpu_custom_call.1} parent=5 // pred_region
        %s463 = ssub.s32 %s17, 2
        // Predicated region
        $region52: #{tpu_custom_call.1} parent=50 // pred_check
          %p464 = pneg %p98
        $region53: #{tpu_custom_call.1} parent=50 // pred_check_branch
          %466 = sbr.rel (%p464) target = $region55
        $region54: #{tpu_custom_call.1} parent=50 // pred_region
          %s467 = sand.u32 %s83, 1
          %s468 = scalar_lea.sflag [#allocation4], %s467
          %s469 = sand.u32 %s83, 1
          %s470 = smul.addr %s469, 8
          %s471 = scalar_lea.vmem [#allocation7], %s470
          %472 = dma.done %s468, 128
        $region55: #{tpu_custom_call.1} parent=50 // pred_fallthru
          _
      $region51: #{tpu_custom_call.1} parent=5 // pred_fallthru
        _
    $region6: #{tpu_custom_call.1} parent=1 // loop_footer
      %s21 = sadd.s32 1, %s17
    $region7: #{tpu_custom_call.1} parent=1 // loop_footer_branch
      %16 = sbr.rel target = $region3
    $region8: #{tpu_custom_call.1} parent=1 // loop_exit
      _
    %473 = vsyncpa [#allocation3], 1
    %s474 = scalar_lea.sflag [#allocation3], 1
    %475 = vsyncpa %s474, 1
    %476 = vsyncpa [#allocation6], 1
    %s477 = scalar_lea.sflag [#allocation6], 1
    %478 = vsyncpa %s477, 1
    %479 = vsyncpa [#allocation4], 1
    %s480 = scalar_lea.sflag [#allocation4], 1
    %481 = vsyncpa %s480, 1

</llo_original>
